<compile_context>
chip_gen: v7x
topology: tpu7x:2x2x1
jax: 0.10.0
libtpu: 0.0.40
codegen_flags: <defaults>
</compile_context>

<pallas_src>
import functools
import math

import jax
import jax.numpy as jnp
from jax.experimental import pallas as pl
from jax.experimental.pallas import tpu as pltpu


TM = 256          # node row tile (tiled path)
TK = 512          # node reduction tile (tiled path, multiple of 256)
LANE = 128        # lane padding for feature dims
SUB = 8           # sublane padding
FUSED_MAX_NP = 2048   # A (bf16) <= 8 MiB -> fused single-kernel path


def _round_up(v, m):
    return ((v + m - 1) // m) * m


# ---------------------------------------------------------------------------
# Pallas kernels
# ---------------------------------------------------------------------------

def fused_kernel(a_ref, xw1_ref, b1_ref, w2_ref, b2_ref, p_ref,
                 wf1_ref, bf1_ref, wf2_ref, bf2_ref, o_ref):
    """conv1 -> relu -> conv2 -> relu -> mean-pool -> fc1 -> relu -> fc2.

    All operands resident in VMEM; A is read once.  Padded rows of h1/h2 only
    contain relu(bias) and are killed by the zero padded columns of A and P.
    """
    a = a_ref[...]                                                     # (Np, Np) bf16
    h1 = jnp.maximum(
        jnp.dot(a, xw1_ref[...], preferred_element_type=jnp.float32)
        + b1_ref[...], 0.0)                                            # (Np, Hp) f32
    hw2 = jnp.dot(h1.astype(jnp.bfloat16), w2_ref[...],
                  preferred_element_type=jnp.float32)                  # (Np, Hp) f32
    h2 = jnp.maximum(
        jnp.dot(a, hw2.astype(jnp.bfloat16),
                preferred_element_type=jnp.float32)
        + b2_ref[...], 0.0)                                            # (Np, Hp) f32
    pooled = jnp.dot(p_ref[...], h2.astype(jnp.bfloat16),
                     preferred_element_type=jnp.float32)               # (Gp, Hp) f32
    z = jnp.maximum(
        jnp.dot(pooled.astype(jnp.bfloat16), wf1_ref[...],
                preferred_element_type=jnp.float32) + bf1_ref[...], 0.0)
    o_ref[...] = jnp.dot(z.astype(jnp.bfloat16), wf2_ref[...],
                         preferred_element_type=jnp.float32) + bf2_ref[...]


def gcn_spmm_kernel(a_ref, hw_ref, b_ref, o_ref, acc_ref, *, tk):
    """relu(A @ HW + b) with A streamed in (TM, TK) tiles and HW VMEM-resident."""
    k = pl.program_id(1)
    start = pl.multiple_of(k * tk, tk)
    prod = jnp.dot(a_ref[...], hw_ref[pl.ds(start, tk), :],
                   preferred_element_type=jnp.float32)

    @pl.when(k == 0)
    def _init():                       # init with first product (no zero-store)
        acc_ref[...] = prod

    @pl.when(k > 0)
    def _acc():
        acc_ref[...] += prod

    @pl.when(k == pl.num_programs(1) - 1)
    def _finalize():
        o_ref[...] = jnp.maximum(acc_ref[...] + b_ref[...], 0.0).astype(o_ref.dtype)


# ---------------------------------------------------------------------------
# pallas_call wrappers
# ---------------------------------------------------------------------------

def fused_forward(A, XW1, b1, w2, b2, P, wf1, bf1, wf2, bf2):
    Np, Hp = XW1.shape
    Gp = P.shape[0]
    F1p = wf1.shape[1]
    out_p = wf2.shape[1]
    args = (A, XW1, b1, w2, b2, P, wf1, bf1, wf2, bf2)

    flops = int(2 * Np * Np * Hp * 2 + 2 * Np * Hp * Hp + 2 * Gp * Np * Hp
                + 2 * Gp * Hp * F1p + 2 * Gp * F1p * out_p)
    in_bytes = sum(int(a.size) * a.dtype.itemsize for a in args)
    bytes_accessed = int(in_bytes + Gp * out_p * 4)
    vmem_limit = int(min(max(2 * in_bytes + 6 * Np * Hp * 4 + (4 << 20),
                             32 << 20), 48 << 20))

    return pl.pallas_call(
        fused_kernel,
        out_shape=jax.ShapeDtypeStruct((Gp, out_p), jnp.float32),
        grid=(1,),
        in_specs=[pl.BlockSpec(a.shape, lambda i, nd=a.ndim: (0,) * nd)
                  for a in args],
        out_specs=pl.BlockSpec((Gp, out_p), lambda i: (0, 0)),
        compiler_params=pltpu.CompilerParams(vmem_limit_bytes=vmem_limit),
        cost_estimate=pl.CostEstimate(flops=flops, transcendentals=0,
                                      bytes_accessed=bytes_accessed),
    )(*args)


def gcn_layer_tiled(A, HW, b):
    """relu(A @ HW + b).  A:(Np,Np)bf16, HW:(Np,Hp)bf16 (resident), b:(1,Hp)f32."""
    Np = A.shape[0]
    Hp = HW.shape[1]
    grid = (Np // TM, Np // TK)

    flops = int(2 * Np * Np * Hp)
    bytes_accessed = int(A.size * 2 + HW.size * 2 + b.size * 4 + Np * Hp * 2)
    vmem_bytes = (2 * TM * TK * 2        # double-buffered A tiles
                  + 2 * Np * Hp * 2      # resident HW (conservative x2)
                  + 2 * TM * Hp * 2      # out tiles
                  + TM * Hp * 4          # f32 accumulator
                  + Hp * 4)              # bias
    vmem_limit = int(min(max(2 * vmem_bytes, 16 << 20), 48 << 20))

    return pl.pallas_call(
        functools.partial(gcn_spmm_kernel, tk=TK),
        out_shape=jax.ShapeDtypeStruct((Np, Hp), jnp.bfloat16),
        grid_spec=pltpu.PrefetchScalarGridSpec(
            num_scalar_prefetch=0,
            grid=grid,
            in_specs=[
                pl.BlockSpec((TM, TK), lambda i, k: (i, k)),    # A row/col tile
                pl.BlockSpec((Np, Hp), lambda i, k: (0, 0)),    # HW fully resident
                pl.BlockSpec((1, Hp), lambda i, k: (0, 0)),     # bias resident
            ],
            out_specs=pl.BlockSpec((TM, Hp), lambda i, k: (i, 0)),
            scratch_shapes=[pltpu.VMEM((TM, Hp), jnp.float32)],
        ),
        compiler_params=pltpu.CompilerParams(
            dimension_semantics=("parallel", "arbitrary"),
            vmem_limit_bytes=vmem_limit),
        cost_estimate=pl.CostEstimate(flops=flops, transcendentals=0,
                                      bytes_accessed=bytes_accessed),
    )(A, HW, b)


# ---------------------------------------------------------------------------
# Plain-JAX glue (fused by XLA inside the jitted forward)
# ---------------------------------------------------------------------------

def compute_edge_weights(edge_attr, w):
    feats = edge_attr[:, 1:4]                           # hmix, delta_r, delta_elec
    s = jax.nn.softplus(feats @ w)[:, 0]                # (E,)
    return s * edge_attr[:, 4]                          # * comp


def build_normalized_adjacency(edge_index, edge_weight, num_nodes, num_nodes_pad):
    # PyG gcn_norm: add self loops (weight 1.0), symmetric deg^-1/2 normalization.
    loop_idx = jnp.arange(num_nodes, dtype=edge_index.dtype)
    src = jnp.concatenate([edge_index[0], loop_idx])
    dst = jnp.concatenate([edge_index[1], loop_idx])
    ew = jnp.concatenate([edge_weight, jnp.ones((num_nodes,), jnp.float32)])

    deg = jnp.zeros((num_nodes,), jnp.float32).at[dst].add(ew)
    # NOTE: reference would propagate inf/NaN for deg<=0; we zero those nodes.
    dis = jnp.where(deg > 0, jax.lax.rsqrt(jnp.maximum(deg, 1e-30)), 0.0)
    norm = dis[src] * ew * dis[dst]

    # message passing out[dst] += norm * x[src]  =>  A[dst, src] += norm.
    # Built directly in bf16 (single HBM pass; duplicate-edge accumulation in
    # bf16 is within overall bf16 tolerance).
    # TODO(synk): for genuinely large sparse graphs replace this dense O(Np^2)
    # build with a CSR SpMM Pallas kernel using scalar-prefetched row offsets.
    A = jnp.zeros((num_nodes_pad, num_nodes_pad), jnp.bfloat16).at[dst, src].add(
        norm.astype(jnp.bfloat16))
    return A


def build_mean_pool_matrix(batch, num_graphs, num_graphs_pad, num_nodes_pad):
    counts = jnp.zeros((num_graphs,), jnp.float32).at[batch].add(1.0)
    onehot = (batch[None, :] == jnp.arange(num_graphs)[:, None]).astype(jnp.float32)
    P = onehot / jnp.maximum(counts, 1.0)[:, None]               # (G, N)
    P = jnp.pad(P, ((0, num_graphs_pad - P.shape[0]),
                    (0, num_nodes_pad - P.shape[1])))
    return P.astype(jnp.bfloat16)


def _pad2(a, rows, cols, dtype=None):
    a = jnp.pad(a, ((0, rows - a.shape[0]), (0, cols - a.shape[1])))
    return a if dtype is None else a.astype(dtype)


@functools.partial(jax.jit, static_argnames=("num_graphs", "force_tiled"))
def forward(params, x, edge_index, edge_attr, batch, num_graphs, force_tiled=False):
    N, _ = x.shape
    hidden = params["w1"].shape[1]
    Hp = _round_up(hidden, LANE)
    F1p = _round_up(params["wf1"].shape[1], LANE)
    Gp = _round_up(max(num_graphs, SUB), SUB)
    out_p = LANE

    x = x.astype(jnp.float32)
    edge_attr = edge_attr.astype(jnp.float32)

    use_fused = (not force_tiled) and (_round_up(max(N, LANE), LANE) <= FUSED_MAX_NP)
    Np = (_round_up(max(N, LANE), LANE) if use_fused
          else _round_up(max(N, TK), TK))       # TK is a multiple of TM

    # edge weights + gcn_norm adjacency + pooling matrix (plain JAX scatter)
    ew = compute_edge_weights(edge_attr, params["w"])
    A = build_normalized_adjacency(edge_index, ew, N, Np)        # (Np, Np) bf16
    P = build_mean_pool_matrix(batch, num_graphs, Gp, Np)        # (Gp, Np) bf16

    # Hoisted layer-1 feature transform (unpadded node_dim contraction).
    xw1 = jnp.dot(x, params["w1"], preferred_element_type=jnp.float32)
    XW1 = _pad2(xw1, Np, Hp, jnp.bfloat16)

    w2 = _pad2(params["w2"], Hp, Hp, jnp.bfloat16)
    b1 = _pad2(params["b1"], 1, Hp)
    b2 = _pad2(params["b2"], 1, Hp)
    wf1 = _pad2(params["wf1"], Hp, F1p, jnp.bfloat16)
    bf1 = _pad2(params["bf1"], 1, F1p)
    wf2 = _pad2(params["wf2"], F1p, out_p, jnp.bfloat16)
    bf2 = _pad2(params["bf2"], 1, out_p)

    if use_fused:
        out_full = fused_forward(A, XW1, b1, w2, b2, P, wf1, bf1, wf2, bf2)
        out = out_full[:num_graphs, 0]
    else:
        h1 = gcn_layer_tiled(A, XW1, b1)                         # (Np, Hp) bf16
        HW2 = jnp.dot(h1, w2,
                      preferred_element_type=jnp.float32).astype(jnp.bfloat16)
        h2 = gcn_layer_tiled(A, HW2, b2)                         # (Np, Hp) bf16
        # Head is tiny FLOPs -> let XLA handle it inline (no extra dispatch).
        pooled = jnp.dot(P, h2, preferred_element_type=jnp.float32)
        z = jnp.maximum(jnp.dot(pooled.astype(jnp.bfloat16), wf1,
                                preferred_element_type=jnp.float32) + bf1, 0.0)
        out_full = jnp.dot(z.astype(jnp.bfloat16), wf2,
                           preferred_element_type=jnp.float32) + bf2
        out = out_full[:num_graphs, 0]

    # NaN guard of the reference module, jit-compatible.
    # TODO(synk): reference returns a 0-d NaN tensor on skip; shape must be
    # static under jit so we return NaNs of shape (G,) instead.
    has_nan = jnp.isnan(x).any() | jnp.isnan(edge_attr).any()
    return jnp.where(has_nan, jnp.full_like(out, jnp.nan), out)


# ---------------------------------------------------------------------------
# Deterministic parameter init (kaiming_uniform, relu gain; biases zero)
# ---------------------------------------------------------------------------

def kaiming_uniform(key, fan_in, shape):
    bound = math.sqrt(6.0 / fan_in)   # gain(relu)=sqrt(2), bound=gain*sqrt(3/fan_in)
    return jax.random.uniform(key, shape, jnp.float32, -bound, bound)


def init_params(key, node_dim, hidden_dim):
    ks = jax.random.split(key, 4)
    return {
        "w": jnp.ones((3, 1), jnp.float32),               # nn.Parameter(torch.ones(3,1))
        # weights stored transposed as (in, out) relative to torch's (out, in)
        "w1": kaiming_uniform(ks[0], node_dim, (node_dim, hidden_dim)),
        "b1": jnp.zeros((1, hidden_dim), jnp.float32),
        "w2": kaiming_uniform(ks[1], hidden_dim, (hidden_dim, hidden_dim)),
        "b2": jnp.zeros((1, hidden_dim), jnp.float32),
        "wf1": kaiming_uniform(ks[2], hidden_dim, (hidden_dim, 32)),
        "bf1": jnp.zeros((1, 32), jnp.float32),
        "wf2": kaiming_uniform(ks[3], 32, (32, 1)),
        "bf2": jnp.zeros((1, 1), jnp.float32),
    }


# ---------------------------------------------------------------------------
# Main
# ---------------------------------------------------------------------------

if __name__ == "__main__":
    key = jax.random.PRNGKey(0)
    N, NODE_DIM, HIDDEN, G, E = 16, 4, 64, 2, 24       # 2 graphs of 8 nodes each

    k_x, k_s0, k_d0, k_s1, k_d1, k_ea, k_p = jax.random.split(key, 7)

    x = jax.random.normal(k_x, (N, NODE_DIM), jnp.float32)

    # edges stay within each graph (nodes 0-7 -> graph 0, nodes 8-15 -> graph 1)
    src0 = jax.random.randint(k_s0, (E // 2,), 0, 8)
    dst0 = jax.random.randint(k_d0, (E // 2,), 0, 8)
    src1 = jax.random.randint(k_s1, (E // 2,), 8, 16)
    dst1 = jax.random.randint(k_d1, (E // 2,), 8, 16)
    edge_index = jnp.stack([jnp.concatenate([src0, src1]),
                            jnp.concatenate([dst0, dst1])]).astype(jnp.int32)

    edge_attr = jax.random.uniform(k_ea, (E, 5), jnp.float32, 0.1, 1.0)
    batch = jnp.concatenate([jnp.zeros(8, jnp.int32), jnp.ones(8, jnp.int32)])

    params = init_params(k_p, NODE_DIM, HIDDEN)

    # Small-N fused single-kernel path.
    out_fused = jax.block_until_ready(
        forward(params, x, edge_index, edge_attr, batch, num_graphs=G))
    # Large-N tiled path (forced here at small size to exercise the kernel).
    out_tiled = jax.block_until_ready(
        forward(params, x, edge_index, edge_attr, batch, num_graphs=G,
                force_tiled=True))

    assert out_fused.shape == (G,) and not bool(jnp.isnan(out_fused).any())
    assert out_tiled.shape == (G,) and not bool(jnp.isnan(out_tiled).any())
    assert bool(jnp.allclose(out_fused, out_tiled, rtol=5e-2, atol=5e-2))
    print("KERNEL_OK")
</pallas_src>

<mosaic_0001>
module attributes {stable_mosaic.version = 11 : i64} {
  func.func private @main(%arg0: i32) attributes {dimension_semantics = [#tpu.dimension_semantics<core_parallel>], iteration_bounds = array<i64: 2>, tpu.core_type = #tpu.core_type<sc_scalar_subcore>, window_params = []} {
    return
  }
}

module attributes {stable_mosaic.version = 11 : i64} {
  func.func private @main(%arg0: i32) attributes {dimension_semantics = [#tpu.dimension_semantics<core_parallel>], iteration_bounds = array<i64: 2>, tpu.core_type = #tpu.core_type<sc_scalar_subcore>, window_params = []} {
    return
  }
}

module attributes {stable_mosaic.version = 11 : i64} {
  func.func @fused_kernel(%arg0: i32, %arg1: memref<128x128xbf16, #tpu.memory_space<vmem>>, %arg2: memref<128x128xbf16, #tpu.memory_space<vmem>>, %arg3: memref<1x128xf32, #tpu.memory_space<vmem>>, %arg4: memref<128x128xbf16, #tpu.memory_space<vmem>>, %arg5: memref<1x128xf32, #tpu.memory_space<vmem>>, %arg6: memref<8x128xbf16, #tpu.memory_space<vmem>>, %arg7: memref<128x128xbf16, #tpu.memory_space<vmem>>, %arg8: memref<1x128xf32, #tpu.memory_space<vmem>>, %arg9: memref<128x128xbf16, #tpu.memory_space<vmem>>, %arg10: memref<1x128xf32, #tpu.memory_space<vmem>>, %arg11: memref<8x128xf32, #tpu.memory_space<vmem>>) attributes {dimension_semantics = [#tpu.dimension_semantics<arbitrary>], iteration_bounds = array<i64: 1>, scalar_prefetch = 0 : i64, scratch_operands = 0 : i64, tpu.core_type = #tpu.core_type<tc>, window_params = [{pipeline_mode = #tpu.pipeline_mode<synchronous>, transform_indices = @transform_0, window_bounds = array<i64: 128, 128>}, {pipeline_mode = #tpu.pipeline_mode<synchronous>, transform_indices = @transform_1, window_bounds = array<i64: 128, 128>}, {pipeline_mode = #tpu.pipeline_mode<synchronous>, transform_indices = @transform_2, window_bounds = array<i64: 1, 128>}, {pipeline_mode = #tpu.pipeline_mode<synchronous>, transform_indices = @transform_3, window_bounds = array<i64: 128, 128>}, {pipeline_mode = #tpu.pipeline_mode<synchronous>, transform_indices = @transform_4, window_bounds = array<i64: 1, 128>}, {pipeline_mode = #tpu.pipeline_mode<synchronous>, transform_indices = @transform_5, window_bounds = array<i64: 8, 128>}, {pipeline_mode = #tpu.pipeline_mode<synchronous>, transform_indices = @transform_6, window_bounds = array<i64: 128, 128>}, {pipeline_mode = #tpu.pipeline_mode<synchronous>, transform_indices = @transform_7, window_bounds = array<i64: 1, 128>}, {pipeline_mode = #tpu.pipeline_mode<synchronous>, transform_indices = @transform_8, window_bounds = array<i64: 128, 128>}, {pipeline_mode = #tpu.pipeline_mode<synchronous>, transform_indices = @transform_9, window_bounds = array<i64: 1, 128>}, {pipeline_mode = #tpu.pipeline_mode<synchronous>, transform_indices = @transform_10, window_bounds = array<i64: 8, 128>}]} {
    %c0 = arith.constant 0 : index
    %c0_0 = arith.constant 0 : index
    %0 = vector.load %arg1[%c0, %c0_0] : memref<128x128xbf16, #tpu.memory_space<vmem>>, vector<128x128xbf16>
    %c0_1 = arith.constant 0 : index
    %c0_2 = arith.constant 0 : index
    %1 = vector.load %arg2[%c0_1, %c0_2] : memref<128x128xbf16, #tpu.memory_space<vmem>>, vector<128x128xbf16>
    %cst = arith.constant dense<0.000000e+00> : vector<128x128xf32>
    %2 = tpu.matmul %0, %1, %cst {dimension_numbers = #tpu.dot_dimension_numbers<[1], [0], [0], [1], [0, 0, 1, 1], [], []>} : vector<128x128xbf16>, vector<128x128xbf16>, vector<128x128xf32> -> vector<128x128xf32>
    %c0_3 = arith.constant 0 : index
    %c0_4 = arith.constant 0 : index
    %3 = vector.load %arg3[%c0_3, %c0_4] : memref<1x128xf32, #tpu.memory_space<vmem>>, vector<1x128xf32>
    %4 = vector.broadcast %3 : vector<1x128xf32> to vector<128x128xf32>
    %5 = arith.addf %2, %4 : vector<128x128xf32>
    %cst_5 = arith.constant 0.000000e+00 : f32
    %6 = vector.broadcast %cst_5 : f32 to vector<128x128xf32>
    %7 = arith.maximumf %5, %6 : vector<128x128xf32>
    %8 = arith.truncf %7 : vector<128x128xf32> to vector<128x128xbf16>
    %c0_6 = arith.constant 0 : index
    %c0_7 = arith.constant 0 : index
    %9 = vector.load %arg4[%c0_6, %c0_7] : memref<128x128xbf16, #tpu.memory_space<vmem>>, vector<128x128xbf16>
    %cst_8 = arith.constant dense<0.000000e+00> : vector<128x128xf32>
    %10 = tpu.matmul %8, %9, %cst_8 {dimension_numbers = #tpu.dot_dimension_numbers<[1], [0], [0], [1], [0, 0, 1, 1], [], []>} : vector<128x128xbf16>, vector<128x128xbf16>, vector<128x128xf32> -> vector<128x128xf32>
    %11 = arith.truncf %10 : vector<128x128xf32> to vector<128x128xbf16>
    %cst_9 = arith.constant dense<0.000000e+00> : vector<128x128xf32>
    %12 = tpu.matmul %0, %11, %cst_9 {dimension_numbers = #tpu.dot_dimension_numbers<[1], [0], [0], [1], [0, 0, 1, 1], [], []>} : vector<128x128xbf16>, vector<128x128xbf16>, vector<128x128xf32> -> vector<128x128xf32>
    %c0_10 = arith.constant 0 : index
    %c0_11 = arith.constant 0 : index
    %13 = vector.load %arg5[%c0_10, %c0_11] : memref<1x128xf32, #tpu.memory_space<vmem>>, vector<1x128xf32>
    %14 = vector.broadcast %13 : vector<1x128xf32> to vector<128x128xf32>
    %15 = arith.addf %12, %14 : vector<128x128xf32>
    %cst_12 = arith.constant 0.000000e+00 : f32
    %16 = vector.broadcast %cst_12 : f32 to vector<128x128xf32>
    %17 = arith.maximumf %15, %16 : vector<128x128xf32>
    %c0_13 = arith.constant 0 : index
    %c0_14 = arith.constant 0 : index
    %18 = vector.load %arg6[%c0_13, %c0_14] : memref<8x128xbf16, #tpu.memory_space<vmem>>, vector<8x128xbf16>
    %19 = arith.truncf %17 : vector<128x128xf32> to vector<128x128xbf16>
    %cst_15 = arith.constant dense<0.000000e+00> : vector<8x128xf32>
    %20 = tpu.matmul %18, %19, %cst_15 {dimension_numbers = #tpu.dot_dimension_numbers<[1], [0], [0], [1], [0, 0, 1, 1], [], []>} : vector<8x128xbf16>, vector<128x128xbf16>, vector<8x128xf32> -> vector<8x128xf32>
    %21 = arith.truncf %20 : vector<8x128xf32> to vector<8x128xbf16>
    %c0_16 = arith.constant 0 : index
    %c0_17 = arith.constant 0 : index
    %22 = vector.load %arg7[%c0_16, %c0_17] : memref<128x128xbf16, #tpu.memory_space<vmem>>, vector<128x128xbf16>
    %cst_18 = arith.constant dense<0.000000e+00> : vector<8x128xf32>
    %23 = tpu.matmul %21, %22, %cst_18 {dimension_numbers = #tpu.dot_dimension_numbers<[1], [0], [0], [1], [0, 0, 1, 1], [], []>} : vector<8x128xbf16>, vector<128x128xbf16>, vector<8x128xf32> -> vector<8x128xf32>
    %c0_19 = arith.constant 0 : index
    %c0_20 = arith.constant 0 : index
    %24 = vector.load %arg8[%c0_19, %c0_20] : memref<1x128xf32, #tpu.memory_space<vmem>>, vector<1x128xf32>
    %25 = vector.broadcast %24 : vector<1x128xf32> to vector<8x128xf32>
    %26 = arith.addf %23, %25 : vector<8x128xf32>
    %cst_21 = arith.constant 0.000000e+00 : f32
    %27 = vector.broadcast %cst_21 : f32 to vector<8x128xf32>
    %28 = arith.maximumf %26, %27 : vector<8x128xf32>
    %29 = arith.truncf %28 : vector<8x128xf32> to vector<8x128xbf16>
    %c0_22 = arith.constant 0 : index
    %c0_23 = arith.constant 0 : index
    %30 = vector.load %arg9[%c0_22, %c0_23] : memref<128x128xbf16, #tpu.memory_space<vmem>>, vector<128x128xbf16>
    %cst_24 = arith.constant dense<0.000000e+00> : vector<8x128xf32>
    %31 = tpu.matmul %29, %30, %cst_24 {dimension_numbers = #tpu.dot_dimension_numbers<[1], [0], [0], [1], [0, 0, 1, 1], [], []>} : vector<8x128xbf16>, vector<128x128xbf16>, vector<8x128xf32> -> vector<8x128xf32>
    %c0_25 = arith.constant 0 : index
    %c0_26 = arith.constant 0 : index
    %32 = vector.load %arg10[%c0_25, %c0_26] : memref<1x128xf32, #tpu.memory_space<vmem>>, vector<1x128xf32>
    %33 = vector.broadcast %32 : vector<1x128xf32> to vector<8x128xf32>
    %34 = arith.addf %31, %33 : vector<8x128xf32>
    %c0_27 = arith.constant 0 : index
    %c0_28 = arith.constant 0 : index
    %35 = vector.load %arg11[%c0_27, %c0_28] : memref<8x128xf32, #tpu.memory_space<vmem>>, vector<8x128xf32>
    tpu.vector_store %arg11[%c0_27, %c0_28], %34 {strides = array<i32>} : memref<8x128xf32, #tpu.memory_space<vmem>>, vector<8x128xf32>,
    return
  }
  func.func @transform_0(%arg0: i32) -> (i32, i32) {
    %c0_i32 = arith.constant 0 : i32
    %c0_i32_0 = arith.constant 0 : i32
    %c0_i32_1 = arith.constant 0 : i32
    return %c0_i32, %c0_i32_0 : i32, i32
  }
  func.func @transform_1(%arg0: i32) -> (i32, i32) {
    %c0_i32 = arith.constant 0 : i32
    %c0_i32_0 = arith.constant 0 : i32
    %c0_i32_1 = arith.constant 0 : i32
    return %c0_i32, %c0_i32_0 : i32, i32
  }
  func.func @transform_2(%arg0: i32) -> (i32, i32) {
    %c0_i32 = arith.constant 0 : i32
    %c0_i32_0 = arith.constant 0 : i32
    %c0_i32_1 = arith.constant 0 : i32
    return %c0_i32, %c0_i32_0 : i32, i32
  }
  func.func @transform_3(%arg0: i32) -> (i32, i32) {
    %c0_i32 = arith.constant 0 : i32
    %c0_i32_0 = arith.constant 0 : i32
    %c0_i32_1 = arith.constant 0 : i32
    return %c0_i32, %c0_i32_0 : i32, i32
  }
  func.func @transform_4(%arg0: i32) -> (i32, i32) {
    %c0_i32 = arith.constant 0 : i32
    %c0_i32_0 = arith.constant 0 : i32
    %c0_i32_1 = arith.constant 0 : i32
    return %c0_i32, %c0_i32_0 : i32, i32
  }
  func.func @transform_5(%arg0: i32) -> (i32, i32) {
    %c0_i32 = arith.constant 0 : i32
    %c0_i32_0 = arith.constant 0 : i32
    %c0_i32_1 = arith.constant 0 : i32
    return %c0_i32, %c0_i32_0 : i32, i32
  }
  func.func @transform_6(%arg0: i32) -> (i32, i32) {
    %c0_i32 = arith.constant 0 : i32
    %c0_i32_0 = arith.constant 0 : i32
    %c0_i32_1 = arith.constant 0 : i32
    return %c0_i32, %c0_i32_0 : i32, i32
  }
  func.func @transform_7(%arg0: i32) -> (i32, i32) {
    %c0_i32 = arith.constant 0 : i32
    %c0_i32_0 = arith.constant 0 : i32
    %c0_i32_1 = arith.constant 0 : i32
    return %c0_i32, %c0_i32_0 : i32, i32
  }
  func.func @transform_8(%arg0: i32) -> (i32, i32) {
    %c0_i32 = arith.constant 0 : i32
    %c0_i32_0 = arith.constant 0 : i32
    %c0_i32_1 = arith.constant 0 : i32
    return %c0_i32, %c0_i32_0 : i32, i32
  }
  func.func @transform_9(%arg0: i32) -> (i32, i32) {
    %c0_i32 = arith.constant 0 : i32
    %c0_i32_0 = arith.constant 0 : i32
    %c0_i32_1 = arith.constant 0 : i32
    return %c0_i32, %c0_i32_0 : i32, i32
  }
  func.func @transform_10(%arg0: i32) -> (i32, i32) {
    %c0_i32 = arith.constant 0 : i32
    %c0_i32_0 = arith.constant 0 : i32
    %c0_i32_1 = arith.constant 0 : i32
    return %c0_i32, %c0_i32_0 : i32, i32
  }
}

</mosaic_0001>

<llo_original>
// kernel: forward.1
$region0: #{forward.1}
  #allocation0 [shape = 'u32[]', space=smem, size = 0x4, offset = 0x4, fixed_abs, tag = 'smem constant byte address 0x4 - core index']
  #allocation1 [shape = 'u32[144,128]{1,0:T(1,128)}', space=vmem, size = 0x12000, scoped, tag = 'internal scratch']
  %s0 = inlined_call_operand.vmem [shape: bf16[128,128], index: 0, kind: input, shape index: {}]
  %s1 = inlined_call_operand.vmem [shape: bf16[128,128], index: 1, kind: input, shape index: {}]
  %s2 = inlined_call_operand.vmem [shape: f32[1,128], index: 2, kind: input, shape index: {}]
  %s3 = inlined_call_operand.vmem [shape: bf16[128,128], index: 3, kind: input, shape index: {}]
  %s4 = inlined_call_operand.vmem [shape: f32[1,128], index: 4, kind: input, shape index: {}]
  %s5 = inlined_call_operand.vmem [shape: bf16[8,128], index: 5, kind: input, shape index: {}]
  %s6 = inlined_call_operand.vmem [shape: bf16[128,128], index: 6, kind: input, shape index: {}]
  %s7 = inlined_call_operand.vmem [shape: f32[1,128], index: 7, kind: input, shape index: {}]
  %s8 = inlined_call_operand.vmem [shape: bf16[128,128], index: 8, kind: input, shape index: {}]
  %s9 = inlined_call_operand.vmem [shape: f32[1,128], index: 9, kind: input, shape index: {}]
  %s10 = inlined_call_operand.vmem [shape: f32[8,128], index: 10, kind: output, shape index: {}]
  %s11 = sld [smem:[#allocation0]]
  $region50: #{forward.1} parent=0
    _
  %s13 = ssub.s32 1, %s11
  %s14 = scalar_select 0, %s13, %s11
  // Predicated region
  $region2: #{forward.1} parent=0 // pred_check
    _
  $region3: #{forward.1} parent=0 // pred_check_branch
    %16 = sbr.rel (0) target = $region5
  $region4: #{forward.1} parent=0 // pred_region
    _
  $region5: #{forward.1} parent=0 // pred_fallthru
    _
  // Predicated region
  $region6: #{forward.1} parent=0 // pred_check
    _
  $region7: #{forward.1} parent=0 // pred_check_branch
    %18 = sbr.rel (0) target = $region9
  $region8: #{forward.1} parent=0 // pred_region
    _
  $region9: #{forward.1} parent=0 // pred_fallthru
    _
  // Predicated region
  $region10: #{forward.1} parent=0 // pred_check
    _
  $region11: #{forward.1} parent=0 // pred_check_branch
    %20 = sbr.rel (0) target = $region13
  $region12: #{forward.1} parent=0 // pred_region
    _
  $region13: #{forward.1} parent=0 // pred_fallthru
    _
  // Predicated region
  $region14: #{forward.1} parent=0 // pred_check
    _
  $region15: #{forward.1} parent=0 // pred_check_branch
    %22 = sbr.rel (0) target = $region17
  $region16: #{forward.1} parent=0 // pred_region
    _
  $region17: #{forward.1} parent=0 // pred_fallthru
    _
  // Predicated region
  $region18: #{forward.1} parent=0 // pred_check
    _
  $region19: #{forward.1} parent=0 // pred_check_branch
    %24 = sbr.rel (0) target = $region21
  $region20: #{forward.1} parent=0 // pred_region
    _
  $region21: #{forward.1} parent=0 // pred_fallthru
    _
  // Predicated region
  $region22: #{forward.1} parent=0 // pred_check
    _
  $region23: #{forward.1} parent=0 // pred_check_branch
    %26 = sbr.rel (0) target = $region25
  $region24: #{forward.1} parent=0 // pred_region
    _
  $region25: #{forward.1} parent=0 // pred_fallthru
    _
  // Predicated region
  $region26: #{forward.1} parent=0 // pred_check
    _
  $region27: #{forward.1} parent=0 // pred_check_branch
    %28 = sbr.rel (0) target = $region29
  $region28: #{forward.1} parent=0 // pred_region
    _
  $region29: #{forward.1} parent=0 // pred_fallthru
    _
  // Predicated region
  $region30: #{forward.1} parent=0 // pred_check
    _
  $region31: #{forward.1} parent=0 // pred_check_branch
    %30 = sbr.rel (0) target = $region33
  $region32: #{forward.1} parent=0 // pred_region
    _
  $region33: #{forward.1} parent=0 // pred_fallthru
    _
  // Predicated region
  $region34: #{forward.1} parent=0 // pred_check
    _
  $region35: #{forward.1} parent=0 // pred_check_branch
    %32 = sbr.rel (0) target = $region37
  $region36: #{forward.1} parent=0 // pred_region
    _
  $region37: #{forward.1} parent=0 // pred_fallthru
    _
  // Predicated region
  $region38: #{forward.1} parent=0 // pred_check
    _
  $region39: #{forward.1} parent=0 // pred_check_branch
    %34 = sbr.rel (0) target = $region41
  $region40: #{forward.1} parent=0 // pred_region
    _
  $region41: #{forward.1} parent=0 // pred_fallthru
    _
  %v36 = vld [vmem:[%s0] sm:$0xf]
  %v37 = vld [vmem:[%s0 + $0x4] sm:$0xf]
  %v38 = vld [vmem:[%s0 + $0x8] sm:$0xf]
  %v39 = vld [vmem:[%s0 + $0xc] sm:$0xf]
  %v40 = vld [vmem:[%s0 + $0x10] sm:$0xf]
  %v41 = vld [vmem:[%s0 + $0x14] sm:$0xf]
  %v42 = vld [vmem:[%s0 + $0x18] sm:$0xf]
  %v43 = vld [vmem:[%s0 + $0x1c] sm:$0xf]
  %v44 = vld [vmem:[%s0 + $0x20] sm:$0xf]
  %v45 = vld [vmem:[%s0 + $0x24] sm:$0xf]
  %v46 = vld [vmem:[%s0 + $0x28] sm:$0xf]
  %v47 = vld [vmem:[%s0 + $0x2c] sm:$0xf]
  %v48 = vld [vmem:[%s0 + $0x30] sm:$0xf]
  %v49 = vld [vmem:[%s0 + $0x34] sm:$0xf]
  %v50 = vld [vmem:[%s0 + $0x38] sm:$0xf]
  %v51 = vld [vmem:[%s0 + $0x3c] sm:$0xf]
  %v52 = vld [vmem:[%s1] sm:$0xf]
  %v53 = vld [vmem:[%s1 + $0x4] sm:$0xf]
  %v54 = vld [vmem:[%s1 + $0x8] sm:$0xf]
  %v55 = vld [vmem:[%s1 + $0xc] sm:$0xf]
  %v56 = vld [vmem:[%s1 + $0x10] sm:$0xf]
  %v57 = vld [vmem:[%s1 + $0x14] sm:$0xf]
  %v58 = vld [vmem:[%s1 + $0x18] sm:$0xf]
  %v59 = vld [vmem:[%s1 + $0x1c] sm:$0xf]
  %v60 = vld [vmem:[%s1 + $0x20] sm:$0xf]
  %v61 = vld [vmem:[%s1 + $0x24] sm:$0xf]
  %v62 = vld [vmem:[%s1 + $0x28] sm:$0xf]
  %v63 = vld [vmem:[%s1 + $0x2c] sm:$0xf]
  %v64 = vld [vmem:[%s1 + $0x30] sm:$0xf]
  %v65 = vld [vmem:[%s1 + $0x34] sm:$0xf]
  %v66 = vld [vmem:[%s1 + $0x38] sm:$0xf]
  %v67 = vld [vmem:[%s1 + $0x3c] sm:$0xf]
  %v68 = vld [vmem:[%s2] sm:$0x1]
  %v70 = vlaneseq
  %v71 = vshrl.u32 %v70, 7
  %v72 = vsub.s32 0, %v71
  %v73 = vrot.slane %v68, %v72
  %v91 = vunpack.c.l.b16 %v36
  %v92 = vunpack.c.l.b16 %v37
  %v93 = vunpack.c.l.b16 %v38
  %v94 = vunpack.c.l.b16 %v39
  %v95 = vunpack.c.l.b16 %v40
  %v96 = vunpack.c.l.b16 %v41
  %v97 = vunpack.c.l.b16 %v42
  %v98 = vunpack.c.l.b16 %v43
  %v99 = vunpack.c.l.b16 %v44
  %v100 = vunpack.c.l.b16 %v45
  %v101 = vunpack.c.l.b16 %v46
  %v102 = vunpack.c.l.b16 %v47
  %v103 = vunpack.c.l.b16 %v48
  %v104 = vunpack.c.l.b16 %v49
  %v105 = vunpack.c.l.b16 %v50
  %v106 = vunpack.c.l.b16 %v51
  %v107 = vpack.c.b16 %v92, %v91
  %v108 = vpack.c.b16 %v94, %v93
  %v109 = vpack.c.b16 %v96, %v95
  %v110 = vpack.c.b16 %v98, %v97
  %v111 = vpack.c.b16 %v100, %v99
  %v112 = vpack.c.b16 %v102, %v101
  %v113 = vpack.c.b16 %v104, %v103
  %v114 = vpack.c.b16 %v106, %v105
  %v139 = vunpack.c.l.b16 %v52
  %v140 = vunpack.c.l.b16 %v53
  %v141 = vunpack.c.l.b16 %v54
  %v142 = vunpack.c.l.b16 %v55
  %v143 = vunpack.c.l.b16 %v56
  %v144 = vunpack.c.l.b16 %v57
  %v145 = vunpack.c.l.b16 %v58
  %v146 = vunpack.c.l.b16 %v59
  %v147 = vunpack.c.l.b16 %v60
  %v148 = vunpack.c.l.b16 %v61
  %v149 = vunpack.c.l.b16 %v62
  %v150 = vunpack.c.l.b16 %v63
  %v151 = vunpack.c.l.b16 %v64
  %v152 = vunpack.c.l.b16 %v65
  %v153 = vunpack.c.l.b16 %v66
  %v154 = vunpack.c.l.b16 %v67
  %v155 = vpack.c.b16 %v140, %v139
  %v156 = vpack.c.b16 %v142, %v141
  %v157 = vpack.c.b16 %v144, %v143
  %v158 = vpack.c.b16 %v146, %v145
  %v159 = vpack.c.b16 %v148, %v147
  %v160 = vpack.c.b16 %v150, %v149
  %v161 = vpack.c.b16 %v152, %v151
  %v162 = vpack.c.b16 %v154, %v153
  %171 = vmatprep.subr.bf16.mxu0 0
  %172 = vmatpush1.bf16.msra.mxu0 %v155
  %173 = vmatprep.subr.bf16.mxu0 0
  %174 = vmatpush1.bf16.msra.mxu0 %v156
  %175 = vmatprep.subr.bf16.mxu0 0
  %176 = vmatpush1.bf16.msra.mxu0 %v157
  %177 = vmatprep.subr.bf16.mxu0 0
  %178 = vmatpush1.bf16.msra.mxu0 %v158
  %179 = vmatprep.subr.bf16.mxu0 0
  %180 = vmatpush1.bf16.msra.mxu0 %v159
  %181 = vmatprep.subr.bf16.mxu0 0
  %182 = vmatpush1.bf16.msra.mxu0 %v160
  %183 = vmatprep.subr.bf16.mxu0 0
  %184 = vmatpush1.bf16.msra.mxu0 %v161
  %185 = vmatprep.subr.bf16.mxu0 0
  %186 = vmatpush1.bf16.msra.mxu0 %v162
  %187 = vmatprep.subr.bf16.mxu0 0
  %188 = vmatpush1.bf16.msra.mxu0 0
  %189 = vmatprep.subr.bf16.mxu0 0
  %190 = vmatpush1.bf16.msra.mxu0 0
  %191 = vmatprep.subr.bf16.mxu0 0
  %192 = vmatpush1.bf16.msra.mxu0 0
  %193 = vmatprep.subr.bf16.mxu0 0
  %194 = vmatpush1.bf16.msra.mxu0 0
  %195 = vmatprep.subr.bf16.mxu0 0
  %196 = vmatpush1.bf16.msra.mxu0 0
  %197 = vmatprep.subr.bf16.mxu0 0
  %198 = vmatpush1.bf16.msra.mxu0 0
  %199 = vmatprep.subr.bf16.mxu0 0
  %200 = vmatpush1.bf16.msra.mxu0 0
  %201 = vmatprep.subr.bf16.mxu0 0
  %202 = vmatpush1.bf16.msra.mxu0 0
  %203 = vmatprep.mubr.bf16.mxu0 0
  %204 = vmatmul.mubr.bf16.gmra.mrb[0].mxu0 %v107
  %v205 = vpop.f32.mrb[0].mxu0
  %v206 = vadd.f32 %v73, %v205
  %v207 = vpop.f32.mrb[0].mxu0
  %v208 = vpop.f32.mrb[0].mxu0
  %v209 = vadd.f32 %v73, %v208
  %v210 = vpop.f32.mrb[0].mxu0
  %211 = vmatprep.mubr.bf16.mxu0 0
  %212 = vmatmul.mubr.bf16.gmra.mrb[0].mxu0 %v108
  %v213 = vpop.f32.mrb[0].mxu0
  %v214 = vadd.f32 %v73, %v213
  %v215 = vpop.f32.mrb[0].mxu0
  %v216 = vpop.f32.mrb[0].mxu0
  %v217 = vadd.f32 %v73, %v216
  %v218 = vpop.f32.mrb[0].mxu0
  %219 = vmatprep.mubr.bf16.mxu0 0
  %220 = vmatmul.mubr.bf16.gmra.mrb[0].mxu0 %v109
  %v221 = vpop.f32.mrb[0].mxu0
  %v222 = vadd.f32 %v73, %v221
  %v223 = vpop.f32.mrb[0].mxu0
  %v224 = vpop.f32.mrb[0].mxu0
  %v225 = vadd.f32 %v73, %v224
  %v226 = vpop.f32.mrb[0].mxu0
  %227 = vmatprep.mubr.bf16.mxu0 0
  %228 = vmatmul.mubr.bf16.gmra.mrb[0].mxu0 %v110
  %v229 = vpop.f32.mrb[0].mxu0
  %v230 = vadd.f32 %v73, %v229
  %v231 = vpop.f32.mrb[0].mxu0
  %v232 = vpop.f32.mrb[0].mxu0
  %v233 = vadd.f32 %v73, %v232
  %v234 = vpop.f32.mrb[0].mxu0
  %235 = vmatprep.mubr.bf16.mxu0 0
  %236 = vmatmul.mubr.bf16.gmra.mrb[0].mxu0 %v111
  %v237 = vpop.f32.mrb[0].mxu0
  %v238 = vadd.f32 %v73, %v237
  %v239 = vpop.f32.mrb[0].mxu0
  %v240 = vpop.f32.mrb[0].mxu0
  %v241 = vadd.f32 %v73, %v240
  %v242 = vpop.f32.mrb[0].mxu0
  %243 = vmatprep.mubr.bf16.mxu0 0
  %244 = vmatmul.mubr.bf16.gmra.mrb[0].mxu0 %v112
  %v245 = vpop.f32.mrb[0].mxu0
  %v246 = vadd.f32 %v73, %v245
  %v247 = vpop.f32.mrb[0].mxu0
  %v248 = vpop.f32.mrb[0].mxu0
  %v249 = vadd.f32 %v73, %v248
  %v250 = vpop.f32.mrb[0].mxu0
  %251 = vmatprep.mubr.bf16.mxu0 0
  %252 = vmatmul.mubr.bf16.gmra.mrb[0].mxu0 %v113
  %v253 = vpop.f32.mrb[0].mxu0
  %v254 = vadd.f32 %v73, %v253
  %v255 = vpop.f32.mrb[0].mxu0
  %v256 = vpop.f32.mrb[0].mxu0
  %v257 = vadd.f32 %v73, %v256
  %v258 = vpop.f32.mrb[0].mxu0
  %259 = vmatprep.mubr.bf16.mxu0 0
  %260 = vmatmul.mubr.bf16.gmra.mrb[0].mxu0 %v114
  %v261 = vpop.f32.mrb[0].mxu0
  %v262 = vadd.f32 %v73, %v261
  %v263 = vpop.f32.mrb[0].mxu0
  %v264 = vpop.f32.mrb[0].mxu0
  %v265 = vadd.f32 %v73, %v264
  %v266 = vpop.f32.mrb[0].mxu0
  %267 = vdwg.mxu0
  %v268 = vmax.f32 %v206, 0.0
  %v269 = vmax.f32 %v209, 0.0
  %v270 = vmax.f32 %v214, 0.0
  %v271 = vmax.f32 %v217, 0.0
  %v272 = vmax.f32 %v222, 0.0
  %v273 = vmax.f32 %v225, 0.0
  %v274 = vmax.f32 %v230, 0.0
  %v275 = vmax.f32 %v233, 0.0
  %v276 = vmax.f32 %v238, 0.0
  %v277 = vmax.f32 %v241, 0.0
  %v278 = vmax.f32 %v246, 0.0
  %v279 = vmax.f32 %v249, 0.0
  %v280 = vmax.f32 %v254, 0.0
  %v281 = vmax.f32 %v257, 0.0
  %v282 = vmax.f32 %v262, 0.0
  %v283 = vmax.f32 %v265, 0.0
  %v284 = vpack.c.bf16 %v269, %v268
  %v285 = vpack.c.bf16 %v271, %v270
  %v286 = vpack.c.bf16 %v273, %v272
  %v287 = vpack.c.bf16 %v275, %v274
  %v288 = vpack.c.bf16 %v277, %v276
  %v289 = vpack.c.bf16 %v279, %v278
  %v290 = vpack.c.bf16 %v281, %v280
  %v291 = vpack.c.bf16 %v283, %v282
  %v292 = vld [vmem:[%s3] sm:$0xf]
  %v293 = vld [vmem:[%s3 + $0x4] sm:$0xf]
  %v294 = vld [vmem:[%s3 + $0x8] sm:$0xf]
  %v295 = vld [vmem:[%s3 + $0xc] sm:$0xf]
  %v296 = vld [vmem:[%s3 + $0x10] sm:$0xf]
  %v297 = vld [vmem:[%s3 + $0x14] sm:$0xf]
  %v298 = vld [vmem:[%s3 + $0x18] sm:$0xf]
  %v299 = vld [vmem:[%s3 + $0x1c] sm:$0xf]
  %v300 = vld [vmem:[%s3 + $0x20] sm:$0xf]
  %v301 = vld [vmem:[%s3 + $0x24] sm:$0xf]
  %v302 = vld [vmem:[%s3 + $0x28] sm:$0xf]
  %v303 = vld [vmem:[%s3 + $0x2c] sm:$0xf]
  %v304 = vld [vmem:[%s3 + $0x30] sm:$0xf]
  %v305 = vld [vmem:[%s3 + $0x34] sm:$0xf]
  %v306 = vld [vmem:[%s3 + $0x38] sm:$0xf]
  %v307 = vld [vmem:[%s3 + $0x3c] sm:$0xf]
  %v324 = vunpack.c.l.b16 %v292
  %v325 = vunpack.c.l.b16 %v293
  %v326 = vunpack.c.l.b16 %v294
  %v327 = vunpack.c.l.b16 %v295
  %v328 = vunpack.c.l.b16 %v296
  %v329 = vunpack.c.l.b16 %v297
  %v330 = vunpack.c.l.b16 %v298
  %v331 = vunpack.c.l.b16 %v299
  %v332 = vunpack.c.l.b16 %v300
  %v333 = vunpack.c.l.b16 %v301
  %v334 = vunpack.c.l.b16 %v302
  %v335 = vunpack.c.l.b16 %v303
  %v336 = vunpack.c.l.b16 %v304
  %v337 = vunpack.c.l.b16 %v305
  %v338 = vunpack.c.l.b16 %v306
  %v339 = vunpack.c.l.b16 %v307
  %v340 = vpack.c.b16 %v325, %v324
  %v341 = vpack.c.b16 %v327, %v326
  %v342 = vpack.c.b16 %v329, %v328
  %v343 = vpack.c.b16 %v331, %v330
  %v344 = vpack.c.b16 %v333, %v332
  %v345 = vpack.c.b16 %v335, %v334
  %v346 = vpack.c.b16 %v337, %v336
  %v347 = vpack.c.b16 %v339, %v338
  %356 = vmatprep.subr.bf16.mxu0 0
  %357 = vmatpush1.bf16.msra.mxu0 %v340
  %358 = vmatprep.subr.bf16.mxu0 0
  %359 = vmatpush1.bf16.msra.mxu0 %v341
  %360 = vmatprep.subr.bf16.mxu0 0
  %361 = vmatpush1.bf16.msra.mxu0 %v342
  %362 = vmatprep.subr.bf16.mxu0 0
  %363 = vmatpush1.bf16.msra.mxu0 %v343
  %364 = vmatprep.subr.bf16.mxu0 0
  %365 = vmatpush1.bf16.msra.mxu0 %v344
  %366 = vmatprep.subr.bf16.mxu0 0
  %367 = vmatpush1.bf16.msra.mxu0 %v345
  %368 = vmatprep.subr.bf16.mxu0 0
  %369 = vmatpush1.bf16.msra.mxu0 %v346
  %370 = vmatprep.subr.bf16.mxu0 0
  %371 = vmatpush1.bf16.msra.mxu0 %v347
  %372 = vmatprep.subr.bf16.mxu0 0
  %373 = vmatpush1.bf16.msra.mxu0 0
  %374 = vmatprep.subr.bf16.mxu0 0
  %375 = vmatpush1.bf16.msra.mxu0 0
  %376 = vmatprep.subr.bf16.mxu0 0
  %377 = vmatpush1.bf16.msra.mxu0 0
  %378 = vmatprep.subr.bf16.mxu0 0
  %379 = vmatpush1.bf16.msra.mxu0 0
  %380 = vmatprep.subr.bf16.mxu0 0
  %381 = vmatpush1.bf16.msra.mxu0 0
  %382 = vmatprep.subr.bf16.mxu0 0
  %383 = vmatpush1.bf16.msra.mxu0 0
  %384 = vmatprep.subr.bf16.mxu0 0
  %385 = vmatpush1.bf16.msra.mxu0 0
  %386 = vmatprep.subr.bf16.mxu0 0
  %387 = vmatpush1.bf16.msra.mxu0 0
  %388 = vmatprep.mubr.bf16.mxu0 0
  %389 = vmatmul.mubr.bf16.gmra.mrb[0].mxu0 %v284
  %v390 = vpop.f32.mrb[0].mxu0
  %v391 = vadd.f32 0.0, %v390
  %v392 = vpop.f32.mrb[0].mxu0
  %v393 = vpop.f32.mrb[0].mxu0
  %v394 = vadd.f32 0.0, %v393
  %v395 = vpop.f32.mrb[0].mxu0
  %396 = vmatprep.mubr.bf16.mxu0 0
  %397 = vmatmul.mubr.bf16.gmra.mrb[0].mxu0 %v285
  %v398 = vpop.f32.mrb[0].mxu0
  %v399 = vadd.f32 0.0, %v398
  %v400 = vpop.f32.mrb[0].mxu0
  %v401 = vpop.f32.mrb[0].mxu0
  %v402 = vadd.f32 0.0, %v401
  %v403 = vpop.f32.mrb[0].mxu0
  %404 = vmatprep.mubr.bf16.mxu0 0
  %405 = vmatmul.mubr.bf16.gmra.mrb[0].mxu0 %v286
  %v406 = vpop.f32.mrb[0].mxu0
  %v407 = vadd.f32 0.0, %v406
  %v408 = vpop.f32.mrb[0].mxu0
  %v409 = vpop.f32.mrb[0].mxu0
  %v410 = vadd.f32 0.0, %v409
  %v411 = vpop.f32.mrb[0].mxu0
  %412 = vmatprep.mubr.bf16.mxu0 0
  %413 = vmatmul.mubr.bf16.gmra.mrb[0].mxu0 %v287
  %v414 = vpop.f32.mrb[0].mxu0
  %v415 = vadd.f32 0.0, %v414
  %v416 = vpop.f32.mrb[0].mxu0
  %v417 = vpop.f32.mrb[0].mxu0
  %v418 = vadd.f32 0.0, %v417
  %v419 = vpop.f32.mrb[0].mxu0
  %420 = vmatprep.mubr.bf16.mxu0 0
  %421 = vmatmul.mubr.bf16.gmra.mrb[0].mxu0 %v288
  %v422 = vpop.f32.mrb[0].mxu0
  %v423 = vadd.f32 0.0, %v422
  %v424 = vpop.f32.mrb[0].mxu0
  %v425 = vpop.f32.mrb[0].mxu0
  %v426 = vadd.f32 0.0, %v425
  %v427 = vpop.f32.mrb[0].mxu0
  %428 = vmatprep.mubr.bf16.mxu0 0
  %429 = vmatmul.mubr.bf16.gmra.mrb[0].mxu0 %v289
  %v430 = vpop.f32.mrb[0].mxu0
  %v431 = vadd.f32 0.0, %v430
  %v432 = vpop.f32.mrb[0].mxu0
  %v433 = vpop.f32.mrb[0].mxu0
  %v434 = vadd.f32 0.0, %v433
  %v435 = vpop.f32.mrb[0].mxu0
  %436 = vmatprep.mubr.bf16.mxu0 0
  %437 = vmatmul.mubr.bf16.gmra.mrb[0].mxu0 %v290
  %v438 = vpop.f32.mrb[0].mxu0
  %v439 = vadd.f32 0.0, %v438
  %v440 = vpop.f32.mrb[0].mxu0
  %v441 = vpop.f32.mrb[0].mxu0
  %v442 = vadd.f32 0.0, %v441
  %v443 = vpop.f32.mrb[0].mxu0
  %444 = vmatprep.mubr.bf16.mxu0 0
  %445 = vmatmul.mubr.bf16.gmra.mrb[0].mxu0 %v291
  %v446 = vpop.f32.mrb[0].mxu0
  %v447 = vadd.f32 0.0, %v446
  %v448 = vpop.f32.mrb[0].mxu0
  %v449 = vpop.f32.mrb[0].mxu0
  %v450 = vadd.f32 0.0, %v449
  %v451 = vpop.f32.mrb[0].mxu0
  %452 = vdwg.mxu0
  %v453 = vpack.c.bf16 %v394, %v391
  %v454 = vpack.c.bf16 %v402, %v399
  %v455 = vpack.c.bf16 %v410, %v407
  %v456 = vpack.c.bf16 %v418, %v415
  %v457 = vpack.c.bf16 %v426, %v423
  %v458 = vpack.c.bf16 %v434, %v431
  %v459 = vpack.c.bf16 %v442, %v439
  %v460 = vpack.c.bf16 %v450, %v447
  %v461 = vld [vmem:[%s4] sm:$0x1]
  %v463 = vlaneseq
  %v464 = vshrl.u32 %v463, 7
  %v465 = vsub.s32 0, %v464
  %v466 = vrot.slane %v461, %v465
  %468 = vmatprep.subr.bf16.mxu0 0
  %469 = vmatpush1.bf16.msra.mxu0 %v453
  %470 = vmatprep.subr.bf16.mxu0 0
  %471 = vmatpush1.bf16.msra.mxu0 %v454
  %472 = vmatprep.subr.bf16.mxu0 0
  %473 = vmatpush1.bf16.msra.mxu0 %v455
  %474 = vmatprep.subr.bf16.mxu0 0
  %475 = vmatpush1.bf16.msra.mxu0 %v456
  %476 = vmatprep.subr.bf16.mxu0 0
  %477 = vmatpush1.bf16.msra.mxu0 %v457
  %478 = vmatprep.subr.bf16.mxu0 0
  %479 = vmatpush1.bf16.msra.mxu0 %v458
  %480 = vmatprep.subr.bf16.mxu0 0
  %481 = vmatpush1.bf16.msra.mxu0 %v459
  %482 = vmatprep.subr.bf16.mxu0 0
  %483 = vmatpush1.bf16.msra.mxu0 %v460
  %484 = vmatprep.subr.bf16.mxu0 0
  %485 = vmatpush1.bf16.msra.mxu0 0
  %486 = vmatprep.subr.bf16.mxu0 0
  %487 = vmatpush1.bf16.msra.mxu0 0
  %488 = vmatprep.subr.bf16.mxu0 0
  %489 = vmatpush1.bf16.msra.mxu0 0
  %490 = vmatprep.subr.bf16.mxu0 0
  %491 = vmatpush1.bf16.msra.mxu0 0
  %492 = vmatprep.subr.bf16.mxu0 0
  %493 = vmatpush1.bf16.msra.mxu0 0
  %494 = vmatprep.subr.bf16.mxu0 0
  %495 = vmatpush1.bf16.msra.mxu0 0
  %496 = vmatprep.subr.bf16.mxu0 0
  %497 = vmatpush1.bf16.msra.mxu0 0
  %498 = vmatprep.subr.bf16.mxu0 0
  %499 = vmatpush1.bf16.msra.mxu0 0
  %500 = vmatprep.mubr.bf16.mxu0 0
  %501 = vmatmul.mubr.bf16.gmra.mrb[0].mxu0 %v107
  %v502 = vpop.f32.mrb[0].mxu0
  %v503 = vadd.f32 %v466, %v502
  %v504 = vpop.f32.mrb[0].mxu0
  %v505 = vpop.f32.mrb[0].mxu0
  %v506 = vadd.f32 %v466, %v505
  %v507 = vpop.f32.mrb[0].mxu0
  %508 = vmatprep.mubr.bf16.mxu0 0
  %509 = vmatmul.mubr.bf16.gmra.mrb[0].mxu0 %v108
  %v510 = vpop.f32.mrb[0].mxu0
  %v511 = vadd.f32 %v466, %v510
  %v512 = vpop.f32.mrb[0].mxu0
  %v513 = vpop.f32.mrb[0].mxu0
  %v514 = vadd.f32 %v466, %v513
  %v515 = vpop.f32.mrb[0].mxu0
  %516 = vmatprep.mubr.bf16.mxu0 0
  %517 = vmatmul.mubr.bf16.gmra.mrb[0].mxu0 %v109
  %v518 = vpop.f32.mrb[0].mxu0
  %v519 = vadd.f32 %v466, %v518
  %v520 = vpop.f32.mrb[0].mxu0
  %v521 = vpop.f32.mrb[0].mxu0
  %v522 = vadd.f32 %v466, %v521
  %v523 = vpop.f32.mrb[0].mxu0
  %524 = vmatprep.mubr.bf16.mxu0 0
  %525 = vmatmul.mubr.bf16.gmra.mrb[0].mxu0 %v110
  %v526 = vpop.f32.mrb[0].mxu0
  %v527 = vadd.f32 %v466, %v526
  %v528 = vpop.f32.mrb[0].mxu0
  %v529 = vpop.f32.mrb[0].mxu0
  %v530 = vadd.f32 %v466, %v529
  %v531 = vpop.f32.mrb[0].mxu0
  %532 = vmatprep.mubr.bf16.mxu0 0
  %533 = vmatmul.mubr.bf16.gmra.mrb[0].mxu0 %v111
  %v534 = vpop.f32.mrb[0].mxu0
  %v535 = vadd.f32 %v466, %v534
  %v536 = vpop.f32.mrb[0].mxu0
  %v537 = vpop.f32.mrb[0].mxu0
  %v538 = vadd.f32 %v466, %v537
  %v539 = vpop.f32.mrb[0].mxu0
  %540 = vmatprep.mubr.bf16.mxu0 0
  %541 = vmatmul.mubr.bf16.gmra.mrb[0].mxu0 %v112
  %v542 = vpop.f32.mrb[0].mxu0
  %v543 = vadd.f32 %v466, %v542
  %v544 = vpop.f32.mrb[0].mxu0
  %v545 = vpop.f32.mrb[0].mxu0
  %v546 = vadd.f32 %v466, %v545
  %v547 = vpop.f32.mrb[0].mxu0
  %548 = vmatprep.mubr.bf16.mxu0 0
  %549 = vmatmul.mubr.bf16.gmra.mrb[0].mxu0 %v113
  %v550 = vpop.f32.mrb[0].mxu0
  %v551 = vadd.f32 %v466, %v550
  %v552 = vpop.f32.mrb[0].mxu0
  %v553 = vpop.f32.mrb[0].mxu0
  %v554 = vadd.f32 %v466, %v553
  %v555 = vpop.f32.mrb[0].mxu0
  %556 = vmatprep.mubr.bf16.mxu0 0
  %557 = vmatmul.mubr.bf16.gmra.mrb[0].mxu0 %v114
  %v558 = vpop.f32.mrb[0].mxu0
  %v559 = vadd.f32 %v466, %v558
  %v560 = vpop.f32.mrb[0].mxu0
  %v561 = vpop.f32.mrb[0].mxu0
  %v562 = vadd.f32 %v466, %v561
  %v563 = vpop.f32.mrb[0].mxu0
  %564 = vdwg.mxu0
  %v565 = vmax.f32 %v503, 0.0
  %v566 = vmax.f32 %v506, 0.0
  %v567 = vmax.f32 %v511, 0.0
  %v568 = vmax.f32 %v514, 0.0
  %v569 = vmax.f32 %v519, 0.0
  %v570 = vmax.f32 %v522, 0.0
  %v571 = vmax.f32 %v527, 0.0
  %v572 = vmax.f32 %v530, 0.0
  %v573 = vmax.f32 %v535, 0.0
  %v574 = vmax.f32 %v538, 0.0
  %v575 = vmax.f32 %v543, 0.0
  %v576 = vmax.f32 %v546, 0.0
  %v577 = vmax.f32 %v551, 0.0
  %v578 = vmax.f32 %v554, 0.0
  %v579 = vmax.f32 %v559, 0.0
  %v580 = vmax.f32 %v562, 0.0
  %v581 = vld [vmem:[%s5] sm:$0xf]
  %v582 = vpack.c.bf16 %v566, %v565
  %v583 = vpack.c.bf16 %v568, %v567
  %v584 = vpack.c.bf16 %v570, %v569
  %v585 = vpack.c.bf16 %v572, %v571
  %v586 = vpack.c.bf16 %v574, %v573
  %v587 = vpack.c.bf16 %v576, %v575
  %v588 = vpack.c.bf16 %v578, %v577
  %v589 = vpack.c.bf16 %v580, %v579
  %590 = vmatprep.subr.bf16.mxu0 0
  %591 = vmatpush1.bf16.msra.mxu0 %v582
  %592 = vmatprep.subr.bf16.mxu0 0
  %593 = vmatpush1.bf16.msra.mxu0 %v583
  %594 = vmatprep.subr.bf16.mxu0 0
  %595 = vmatpush1.bf16.msra.mxu0 %v584
  %596 = vmatprep.subr.bf16.mxu0 0
  %597 = vmatpush1.bf16.msra.mxu0 %v585
  %598 = vmatprep.subr.bf16.mxu0 0
  %599 = vmatpush1.bf16.msra.mxu0 %v586
  %600 = vmatprep.subr.bf16.mxu0 0
  %601 = vmatpush1.bf16.msra.mxu0 %v587
  %602 = vmatprep.subr.bf16.mxu0 0
  %603 = vmatpush1.bf16.msra.mxu0 %v588
  %604 = vmatprep.subr.bf16.mxu0 0
  %605 = vmatpush1.bf16.msra.mxu0 %v589
  %606 = vmatprep.subr.bf16.mxu0 0
  %607 = vmatpush1.bf16.msra.mxu0 0
  %608 = vmatprep.subr.bf16.mxu0 0
  %609 = vmatpush1.bf16.msra.mxu0 0
  %610 = vmatprep.subr.bf16.mxu0 0
  %611 = vmatpush1.bf16.msra.mxu0 0
  %612 = vmatprep.subr.bf16.mxu0 0
  %613 = vmatpush1.bf16.msra.mxu0 0
  %614 = vmatprep.subr.bf16.mxu0 0
  %615 = vmatpush1.bf16.msra.mxu0 0
  %616 = vmatprep.subr.bf16.mxu0 0
  %617 = vmatpush1.bf16.msra.mxu0 0
  %618 = vmatprep.subr.bf16.mxu0 0
  %619 = vmatpush1.bf16.msra.mxu0 0
  %620 = vmatprep.subr.bf16.mxu0 0
  %621 = vmatpush1.bf16.msra.mxu0 0
  %622 = vmatprep.mubr.bf16.mxu0 0
  %623 = vmatmul.mubr.bf16.gmra.mrb[0].mxu0 %v581
  %v624 = vpop.f32.mrb[0].mxu0
  %v625 = vadd.f32 0.0, %v624
  %v626 = vpop.f32.mrb[0].mxu0
  %v627 = vpop.f32.mrb[0].mxu0
  %v628 = vpop.f32.mrb[0].mxu0
  %629 = vdwg.mxu0
  %v630 = vpack.c.bf16 %v625, %v625
  %v631 = vld [vmem:[%s6] sm:$0xf]
  %v632 = vld [vmem:[%s6 + $0x4] sm:$0xf]
  %v633 = vld [vmem:[%s6 + $0x8] sm:$0xf]
  %v634 = vld [vmem:[%s6 + $0xc] sm:$0xf]
  %v635 = vld [vmem:[%s6 + $0x10] sm:$0xf]
  %v636 = vld [vmem:[%s6 + $0x14] sm:$0xf]
  %v637 = vld [vmem:[%s6 + $0x18] sm:$0xf]
  %v638 = vld [vmem:[%s6 + $0x1c] sm:$0xf]
  %v639 = vld [vmem:[%s6 + $0x20] sm:$0xf]
  %v640 = vld [vmem:[%s6 + $0x24] sm:$0xf]
  %v641 = vld [vmem:[%s6 + $0x28] sm:$0xf]
  %v642 = vld [vmem:[%s6 + $0x2c] sm:$0xf]
  %v643 = vld [vmem:[%s6 + $0x30] sm:$0xf]
  %v644 = vld [vmem:[%s6 + $0x34] sm:$0xf]
  %v645 = vld [vmem:[%s6 + $0x38] sm:$0xf]
  %v646 = vld [vmem:[%s6 + $0x3c] sm:$0xf]
  %v647 = vld [vmem:[%s7] sm:$0x1]
  %v649 = vlaneseq
  %v650 = vshrl.u32 %v649, 7
  %v651 = vsub.s32 0, %v650
  %v652 = vrot.slane %v647, %v651
  %v670 = vunpack.c.l.b16 %v631
  %v671 = vunpack.c.l.b16 %v632
  %v672 = vunpack.c.l.b16 %v633
  %v673 = vunpack.c.l.b16 %v634
  %v674 = vunpack.c.l.b16 %v635
  %v675 = vunpack.c.l.b16 %v636
  %v676 = vunpack.c.l.b16 %v637
  %v677 = vunpack.c.l.b16 %v638
  %v678 = vunpack.c.l.b16 %v639
  %v679 = vunpack.c.l.b16 %v640
  %v680 = vunpack.c.l.b16 %v641
  %v681 = vunpack.c.l.b16 %v642
  %v682 = vunpack.c.l.b16 %v643
  %v683 = vunpack.c.l.b16 %v644
  %v684 = vunpack.c.l.b16 %v645
  %v685 = vunpack.c.l.b16 %v646
  %v686 = vpack.c.b16 %v671, %v670
  %v687 = vpack.c.b16 %v673, %v672
  %v688 = vpack.c.b16 %v675, %v674
  %v689 = vpack.c.b16 %v677, %v676
  %v690 = vpack.c.b16 %v679, %v678
  %v691 = vpack.c.b16 %v681, %v680
  %v692 = vpack.c.b16 %v683, %v682
  %v693 = vpack.c.b16 %v685, %v684
  %702 = vmatprep.subr.bf16.mxu0 0
  %703 = vmatpush1.bf16.msra.mxu0 %v686
  %704 = vmatprep.subr.bf16.mxu0 0
  %705 = vmatpush1.bf16.msra.mxu0 %v687
  %706 = vmatprep.subr.bf16.mxu0 0
  %707 = vmatpush1.bf16.msra.mxu0 %v688
  %708 = vmatprep.subr.bf16.mxu0 0
  %709 = vmatpush1.bf16.msra.mxu0 %v689
  %710 = vmatprep.subr.bf16.mxu0 0
  %711 = vmatpush1.bf16.msra.mxu0 %v690
  %712 = vmatprep.subr.bf16.mxu0 0
  %713 = vmatpush1.bf16.msra.mxu0 %v691
  %714 = vmatprep.subr.bf16.mxu0 0
  %715 = vmatpush1.bf16.msra.mxu0 %v692
  %716 = vmatprep.subr.bf16.mxu0 0
  %717 = vmatpush1.bf16.msra.mxu0 %v693
  %718 = vmatprep.subr.bf16.mxu0 0
  %719 = vmatpush1.bf16.msra.mxu0 0
  %720 = vmatprep.subr.bf16.mxu0 0
  %721 = vmatpush1.bf16.msra.mxu0 0
  %722 = vmatprep.subr.bf16.mxu0 0
  %723 = vmatpush1.bf16.msra.mxu0 0
  %724 = vmatprep.subr.bf16.mxu0 0
  %725 = vmatpush1.bf16.msra.mxu0 0
  %726 = vmatprep.subr.bf16.mxu0 0
  %727 = vmatpush1.bf16.msra.mxu0 0
  %728 = vmatprep.subr.bf16.mxu0 0
  %729 = vmatpush1.bf16.msra.mxu0 0
  %730 = vmatprep.subr.bf16.mxu0 0
  %731 = vmatpush1.bf16.msra.mxu0 0
  %732 = vmatprep.subr.bf16.mxu0 0
  %733 = vmatpush1.bf16.msra.mxu0 0
  %734 = vmatprep.mubr.bf16.mxu0 0
  %735 = vmatmul.mubr.bf16.gmra.mrb[0].mxu0 %v630
  %v736 = vpop.f32.mrb[0].mxu0
  %v737 = vadd.f32 %v652, %v736
  %v738 = vpop.f32.mrb[0].mxu0
  %v739 = vpop.f32.mrb[0].mxu0
  %v740 = vpop.f32.mrb[0].mxu0
  %741 = vdwg.mxu0
  %v742 = vmax.f32 %v737, 0.0
  %v743 = vpack.c.bf16 %v742, %v742
  %v744 = vld [vmem:[%s8] sm:$0xf]
  %v745 = vld [vmem:[%s8 + $0x4] sm:$0xf]
  %v746 = vld [vmem:[%s8 + $0x8] sm:$0xf]
  %v747 = vld [vmem:[%s8 + $0xc] sm:$0xf]
  %v748 = vld [vmem:[%s8 + $0x10] sm:$0xf]
  %v749 = vld [vmem:[%s8 + $0x14] sm:$0xf]
  %v750 = vld [vmem:[%s8 + $0x18] sm:$0xf]
  %v751 = vld [vmem:[%s8 + $0x1c] sm:$0xf]
  %v752 = vld [vmem:[%s8 + $0x20] sm:$0xf]
  %v753 = vld [vmem:[%s8 + $0x24] sm:$0xf]
  %v754 = vld [vmem:[%s8 + $0x28] sm:$0xf]
  %v755 = vld [vmem:[%s8 + $0x2c] sm:$0xf]
  %v756 = vld [vmem:[%s8 + $0x30] sm:$0xf]
  %v757 = vld [vmem:[%s8 + $0x34] sm:$0xf]
  %v758 = vld [vmem:[%s8 + $0x38] sm:$0xf]
  %v759 = vld [vmem:[%s8 + $0x3c] sm:$0xf]
  %v760 = vld [vmem:[%s9] sm:$0x1]
  %v762 = vlaneseq
  %v763 = vshrl.u32 %v762, 7
  %v764 = vsub.s32 0, %v763
  %v765 = vrot.slane %v760, %v764
  %v783 = vunpack.c.l.b16 %v744
  %v784 = vunpack.c.l.b16 %v745
  %v785 = vunpack.c.l.b16 %v746
  %v786 = vunpack.c.l.b16 %v747
  %v787 = vunpack.c.l.b16 %v748
  %v788 = vunpack.c.l.b16 %v749
  %v789 = vunpack.c.l.b16 %v750
  %v790 = vunpack.c.l.b16 %v751
  %v791 = vunpack.c.l.b16 %v752
  %v792 = vunpack.c.l.b16 %v753
  %v793 = vunpack.c.l.b16 %v754
  %v794 = vunpack.c.l.b16 %v755
  %v795 = vunpack.c.l.b16 %v756
  %v796 = vunpack.c.l.b16 %v757
  %v797 = vunpack.c.l.b16 %v758
  %v798 = vunpack.c.l.b16 %v759
  %v799 = vpack.c.b16 %v784, %v783
  %v800 = vpack.c.b16 %v786, %v785
  %v801 = vpack.c.b16 %v788, %v787
  %v802 = vpack.c.b16 %v790, %v789
  %v803 = vpack.c.b16 %v792, %v791
  %v804 = vpack.c.b16 %v794, %v793
  %v805 = vpack.c.b16 %v796, %v795
  %v806 = vpack.c.b16 %v798, %v797
  %815 = vmatprep.subr.bf16.mxu0 0
  %816 = vmatpush1.bf16.msra.mxu0 %v799
  %817 = vmatprep.subr.bf16.mxu0 0
  %818 = vmatpush1.bf16.msra.mxu0 %v800
  %819 = vmatprep.subr.bf16.mxu0 0
  %820 = vmatpush1.bf16.msra.mxu0 %v801
  %821 = vmatprep.subr.bf16.mxu0 0
  %822 = vmatpush1.bf16.msra.mxu0 %v802
  %823 = vmatprep.subr.bf16.mxu0 0
  %824 = vmatpush1.bf16.msra.mxu0 %v803
  %825 = vmatprep.subr.bf16.mxu0 0
  %826 = vmatpush1.bf16.msra.mxu0 %v804
  %827 = vmatprep.subr.bf16.mxu0 0
  %828 = vmatpush1.bf16.msra.mxu0 %v805
  %829 = vmatprep.subr.bf16.mxu0 0
  %830 = vmatpush1.bf16.msra.mxu0 %v806
  %831 = vmatprep.subr.bf16.mxu0 0
  %832 = vmatpush1.bf16.msra.mxu0 0
  %833 = vmatprep.subr.bf16.mxu0 0
  %834 = vmatpush1.bf16.msra.mxu0 0
  %835 = vmatprep.subr.bf16.mxu0 0
  %836 = vmatpush1.bf16.msra.mxu0 0
  %837 = vmatprep.subr.bf16.mxu0 0
  %838 = vmatpush1.bf16.msra.mxu0 0
  %839 = vmatprep.subr.bf16.mxu0 0
  %840 = vmatpush1.bf16.msra.mxu0 0
  %841 = vmatprep.subr.bf16.mxu0 0
  %842 = vmatpush1.bf16.msra.mxu0 0
  %843 = vmatprep.subr.bf16.mxu0 0
  %844 = vmatpush1.bf16.msra.mxu0 0
  %845 = vmatprep.subr.bf16.mxu0 0
  %846 = vmatpush1.bf16.msra.mxu0 0
  %847 = vmatprep.mubr.bf16.mxu0 0
  %848 = vmatmul.mubr.bf16.gmra.mrb[0].mxu0 %v743
  %v849 = vpop.f32.mrb[0].mxu0
  %v850 = vadd.f32 %v765, %v849
  %v851 = vpop.f32.mrb[0].mxu0
  %v852 = vpop.f32.mrb[0].mxu0
  %v853 = vpop.f32.mrb[0].mxu0
  %854 = vdwg.mxu0
  %855 = vst [vmem:[%s10] sm:$0xff] %v850
  // Predicated region
  $region42: #{forward.1} parent=0 // pred_check
    _
  $region43: #{forward.1} parent=0 // pred_check_branch
    %857 = sbr.rel (0) target = $region45
  $region44: #{forward.1} parent=0 // pred_region
    _
  $region45: #{forward.1} parent=0 // pred_fallthru
    _
  // Predicated region
  $region46: #{forward.1} parent=0 // pred_check
    _
  $region47: #{forward.1} parent=0 // pred_check_branch
    %859 = sbr.rel (0) target = $region49
  $region48: #{forward.1} parent=0 // pred_region
    _
  $region49: #{forward.1} parent=0 // pred_fallthru
    _

</llo_original>
